<compile_context>
chip_gen: v7x
topology: tpu7x:2x2x1
jax: 0.10.0
libtpu: 0.0.40
codegen_flags: <defaults>
</compile_context>

<pallas_src>
import functools

import jax
import jax.numpy as jnp
from jax.experimental import pallas as pl
from jax.experimental.pallas import tpu as pltpu


def _round_up(x, m):
    return ((x + m - 1) // m) * m


def _compact_block_kernel(x_ref, s1_ref, b1_ref, w_ref, s2_ref, bias_ref, o_ref,
                          *, dot_dtype):
    # BN1 (folded per-feature affine) + ReLU in f32 on the VPU.  bf16 inputs are
    # upcast here, in-kernel, never in the wrapper (a wrapper astype is a separate
    # un-hidden XLA pass).
    h = x_ref[...].astype(jnp.float32) * s1_ref[...] + b1_ref[...]
    h = jnp.maximum(h, 0.0)
    # Dropout: identity in eval mode.
    # Linear on the MXU.  The weight is kept UNscaled in dot_dtype; BN2's scale is
    # applied in the f32 epilogue so bf16 weight rounding is not compounded.
    y = jnp.dot(h.astype(dot_dtype), w_ref[...], preferred_element_type=jnp.float32)
    # BN2 folded into the f32 epilogue: y*s2 + (fc_b*s2 + beta2 - mean2*s2).
    o_ref[...] = (y * s2_ref[...] + bias_ref[...]).astype(o_ref.dtype)


def compact_block(x, params, eps=1e-5, *, dot_dtype=jnp.bfloat16, out_dtype=None,
                  block_rows=512, block_cols=None, pad_lanes=True,
                  return_padded=False, single_buffer_resident=False,
                  core_parallel=False):
    """Fused eval-mode CompactBlock forward.

    x: (N, in_features), f32 or bf16.  params: dict of BN/Linear parameters.
    """
    n, cin = x.shape
    cout = params["fc_w"].shape[0]
    out_dtype = x.dtype if out_dtype is None else out_dtype

    # ---- fold BN1 running stats + affine into per-feature scale/shift (f32) ----
    inv_std1 = 1.0 / jnp.sqrt(params["bn1_var"] + eps)
    s1 = (params["bn1_gamma"] * inv_std1).reshape(1, cin).astype(jnp.float32)
    b1 = (params["bn1_beta"] - params["bn1_mean"] * params["bn1_gamma"] * inv_std1)
    b1 = b1.reshape(1, cin).astype(jnp.float32)

    # ---- BN2 as an f32 epilogue: scale s2 and folded bias ----
    inv_std2 = 1.0 / jnp.sqrt(params["bn2_var"] + eps)
    s2 = params["bn2_gamma"] * inv_std2                                  # (cout,)
    bias2 = params["fc_b"] * s2 + params["bn2_beta"] - params["bn2_mean"] * s2

    w_t = params["fc_w"].T                                               # (cin, cout)

    # ---- optional lane padding of Cout (dense vst) ----
    cout_pad = _round_up(cout, 128) if pad_lanes else cout
    if cout_pad != cout:
        w_t = jnp.pad(w_t, ((0, 0), (0, cout_pad - cout)))
        s2 = jnp.pad(s2, (0, cout_pad - cout))
        bias2 = jnp.pad(bias2, (0, cout_pad - cout))
    w_t = w_t.astype(dot_dtype)
    s2 = s2.reshape(1, cout_pad).astype(jnp.float32)
    bias2 = bias2.reshape(1, cout_pad).astype(jnp.float32)

    # ---- row tiling: pad rows only to a multiple of 8, partial last tile is masked ----
    n_pad8 = _round_up(n, 8)
    if n_pad8 != n:
        x = jnp.pad(x, ((0, n_pad8 - n), (0, 0)))
    tm = max(8, (min(block_rows, n_pad8) // 8) * 8)
    grid_rows = pl.cdiv(n_pad8, tm)

    # ---- optional Cout tiling (stream large weights as (cin, tn) lane-dense tiles) ----
    if block_cols is not None and cout_pad % 128 == 0:
        tn = min(max(128, (block_cols // 128) * 128), cout_pad)
    else:
        tn = cout_pad
    grid_cols = pl.cdiv(cout_pad, tn)
    weight_resident = grid_cols == 1

    def spec(shape, index_map, *, resident=False):
        # Constant-index operands may be single-buffered (halves their VMEM on v7x).
        if single_buffer_resident and resident:
            return pl.BlockSpec(shape, index_map, pipeline_mode=pl.Buffered(1))
        return pl.BlockSpec(shape, index_map)

    in_specs = [
        pl.BlockSpec((tm, cin), lambda j, i: (i, 0)),                    # x: pipelined rows
        spec((1, cin), lambda j, i: (0, 0), resident=True),              # bn1 scale
        spec((1, cin), lambda j, i: (0, 0), resident=True),              # bn1 shift
        spec((cin, tn), lambda j, i: (0, j), resident=weight_resident),  # weight (unscaled)
        spec((1, tn), lambda j, i: (0, j), resident=weight_resident),    # bn2 scale
        spec((1, tn), lambda j, i: (0, j), resident=weight_resident),    # folded bias
    ]

    # ---- VMEM budget: double-buffered streamed tiles + resident operands ----
    itemsize = lambda dt: jnp.dtype(dt).itemsize
    res_bufs = 1 if single_buffer_resident else 2
    vmem_need = (2 * tm * cin * itemsize(x.dtype)
                 + 2 * tm * tn * itemsize(out_dtype)
                 + res_bufs * cin * tn * itemsize(dot_dtype)
                 + res_bufs * 4 * (2 * cin + 2 * tn))
    vmem_limit = int(min(max(2 * vmem_need + (4 << 20), 32 << 20), 96 << 20))

    row_semantics = pltpu.CORE_PARALLEL if core_parallel else "parallel"

    out = pl.pallas_call(
        functools.partial(_compact_block_kernel, dot_dtype=dot_dtype),
        out_shape=jax.ShapeDtypeStruct((n, cout_pad), out_dtype),
        grid=(grid_cols, grid_rows),                 # weight tile outer, rows inner
        in_specs=in_specs,
        out_specs=pl.BlockSpec((tm, tn), lambda j, i: (i, j)),
        compiler_params=pltpu.CompilerParams(
            dimension_semantics=("parallel", row_semantics),
            vmem_limit_bytes=vmem_limit,
        ),
    )(x, s1, b1, w_t, s2, bias2)

    if return_padded:
        # Caller consumes the (N, cout_pad) buffer directly; padded lanes are zeros
        # and must never be treated as valid features downstream.
        return out
    if cout_pad != cout:
        out = out[:, :cout]                          # only slice when lanes were padded
    return out


def reference(x, params, eps=1e-5):
    """Plain-JAX reference mirroring PyTorch eval-mode forward."""
    h = (x - params["bn1_mean"]) / jnp.sqrt(params["bn1_var"] + eps)
    h = h * params["bn1_gamma"] + params["bn1_beta"]
    h = jnp.maximum(h, 0.0)
    y = h @ params["fc_w"].T + params["fc_b"]
    y = (y - params["bn2_mean"]) / jnp.sqrt(params["bn2_var"] + eps)
    y = y * params["bn2_gamma"] + params["bn2_beta"]
    return y


if __name__ == "__main__":
    N, C_IN, C_OUT = 8, 32, 64

    key = jax.random.PRNGKey(0)
    keys = jax.random.split(key, 11)

    x = jax.random.normal(keys[0], (N, C_IN), jnp.float32)

    params = {
        "bn1_gamma": 1.0 + 0.1 * jax.random.normal(keys[1], (C_IN,), jnp.float32),
        "bn1_beta": 0.1 * jax.random.normal(keys[2], (C_IN,), jnp.float32),
        "bn1_mean": 0.1 * jax.random.normal(keys[3], (C_IN,), jnp.float32),
        "bn1_var": jnp.abs(1.0 + 0.1 * jax.random.normal(keys[4], (C_IN,), jnp.float32)),
        "fc_w": jax.random.normal(keys[5], (C_OUT, C_IN), jnp.float32) * (1.0 / jnp.sqrt(C_IN)),
        "fc_b": 0.1 * jax.random.normal(keys[6], (C_OUT,), jnp.float32),
        "bn2_gamma": 1.0 + 0.1 * jax.random.normal(keys[7], (C_OUT,), jnp.float32),
        "bn2_beta": 0.1 * jax.random.normal(keys[8], (C_OUT,), jnp.float32),
        "bn2_mean": 0.1 * jax.random.normal(keys[9], (C_OUT,), jnp.float32),
        "bn2_var": jnp.ones((C_OUT,), jnp.float32),
    }

    ref = reference(x, params)

    # 1) f32-dot path: tight check against the reference.
    out_f32 = jax.block_until_ready(compact_block(x, params, dot_dtype=jnp.float32))
    assert out_f32.shape == (N, C_OUT)
    assert jnp.allclose(out_f32, ref, atol=1e-4, rtol=1e-4), "f32-dot mismatch vs reference"

    # 2) default bf16-dot (MXU-rate operands, f32 accumulation), f32 I/O.
    out_bf = jax.block_until_ready(compact_block(x, params))
    assert out_bf.shape == (N, C_OUT)
    assert jnp.allclose(out_bf, ref, atol=2e-2, rtol=2e-2), "bf16-dot mismatch vs reference"

    # 3) bf16 at the boundary (producer emits bf16, consumer accepts bf16): halves the
    #    streamed-HBM traffic on this mem-bound kernel.
    x_bf16 = x.astype(jnp.bfloat16)   # stands in for an upstream producer already in bf16
    out_bf_io = jax.block_until_ready(compact_block(x_bf16, params, out_dtype=jnp.bfloat16))
    assert out_bf_io.dtype == jnp.bfloat16 and out_bf_io.shape == (N, C_OUT)
    assert jnp.allclose(out_bf_io.astype(jnp.float32), ref, atol=6e-2, rtol=6e-2), \
        "bf16-I/O mismatch vs reference"

    # 4) ragged batch + unpadded (masked-store) small-Cout path: N=20 pads only to 24
    #    rows, grid_rows = cdiv(24, 16) = 2 with a partial last tile; Cout=64 stays
    #    unpadded (no 2x writeback, no wrapper slice pass).
    x2 = jax.random.normal(keys[10], (20, C_IN), jnp.float32)
    ref2 = reference(x2, params)
    out2 = jax.block_until_ready(
        compact_block(x2, params, dot_dtype=jnp.float32, block_rows=16, pad_lanes=False))
    assert out2.shape == (20, C_OUT)
    assert jnp.allclose(out2, ref2, atol=1e-4, rtol=1e-4), \
        "partial-tile / masked-store mismatch vs reference"

    print("KERNEL_OK")
</pallas_src>

<mosaic_0001>
module attributes {stable_mosaic.version = 11 : i64} {
  func.func @_compact_block_kernel(%arg0: i32, %arg1: i32, %arg2: memref<8x32xf32, #tpu.memory_space<vmem>>, %arg3: memref<1x32xf32, #tpu.memory_space<vmem>>, %arg4: memref<1x32xf32, #tpu.memory_space<vmem>>, %arg5: memref<32x128xf32, #tpu.memory_space<vmem>>, %arg6: memref<1x128xf32, #tpu.memory_space<vmem>>, %arg7: memref<1x128xf32, #tpu.memory_space<vmem>>, %arg8: memref<8x128xf32, #tpu.memory_space<vmem>>) attributes {dimension_semantics = [#tpu.dimension_semantics<parallel>, #tpu.dimension_semantics<parallel>], iteration_bounds = array<i64: 1, 1>, scalar_prefetch = 0 : i64, scratch_operands = 0 : i64, tpu.core_type = #tpu.core_type<tc>, window_params = [{transform_indices = @transform_0, window_bounds = array<i64: 8, 32>}, {pipeline_mode = #tpu.pipeline_mode<synchronous>, transform_indices = @transform_1, window_bounds = array<i64: 1, 32>}, {pipeline_mode = #tpu.pipeline_mode<synchronous>, transform_indices = @transform_2, window_bounds = array<i64: 1, 32>}, {transform_indices = @transform_3, window_bounds = array<i64: 32, 128>}, {transform_indices = @transform_4, window_bounds = array<i64: 1, 128>}, {transform_indices = @transform_5, window_bounds = array<i64: 1, 128>}, {transform_indices = @transform_6, window_bounds = array<i64: 8, 128>}]} {
    %c0 = arith.constant 0 : index
    %c0_0 = arith.constant 0 : index
    %0 = vector.load %arg2[%c0, %c0_0] : memref<8x32xf32, #tpu.memory_space<vmem>>, vector<8x32xf32>
    %c0_1 = arith.constant 0 : index
    %c0_2 = arith.constant 0 : index
    %1 = vector.load %arg3[%c0_1, %c0_2] : memref<1x32xf32, #tpu.memory_space<vmem>>, vector<1x32xf32>
    %2 = vector.broadcast %1 : vector<1x32xf32> to vector<8x32xf32>
    %3 = arith.mulf %0, %2 : vector<8x32xf32>
    %c0_3 = arith.constant 0 : index
    %c0_4 = arith.constant 0 : index
    %4 = vector.load %arg4[%c0_3, %c0_4] : memref<1x32xf32, #tpu.memory_space<vmem>>, vector<1x32xf32>
    %5 = vector.broadcast %4 : vector<1x32xf32> to vector<8x32xf32>
    %6 = arith.addf %3, %5 : vector<8x32xf32>
    %cst = arith.constant 0.000000e+00 : f32
    %7 = vector.broadcast %cst : f32 to vector<8x32xf32>
    %8 = arith.maximumf %6, %7 : vector<8x32xf32>
    %c0_5 = arith.constant 0 : index
    %c0_6 = arith.constant 0 : index
    %9 = vector.load %arg5[%c0_5, %c0_6] : memref<32x128xf32, #tpu.memory_space<vmem>>, vector<32x128xf32>
    %cst_7 = arith.constant dense<0.000000e+00> : vector<8x128xf32>
    %10 = tpu.matmul %8, %9, %cst_7 {dimension_numbers = #tpu.dot_dimension_numbers<[1], [0], [0], [1], [0, 0, 1, 1], [], []>} : vector<8x32xf32>, vector<32x128xf32>, vector<8x128xf32> -> vector<8x128xf32>
    %c0_8 = arith.constant 0 : index
    %c0_9 = arith.constant 0 : index
    %11 = vector.load %arg6[%c0_8, %c0_9] : memref<1x128xf32, #tpu.memory_space<vmem>>, vector<1x128xf32>
    %12 = vector.broadcast %11 : vector<1x128xf32> to vector<8x128xf32>
    %13 = arith.mulf %10, %12 : vector<8x128xf32>
    %c0_10 = arith.constant 0 : index
    %c0_11 = arith.constant 0 : index
    %14 = vector.load %arg7[%c0_10, %c0_11] : memref<1x128xf32, #tpu.memory_space<vmem>>, vector<1x128xf32>
    %15 = vector.broadcast %14 : vector<1x128xf32> to vector<8x128xf32>
    %16 = arith.addf %13, %15 : vector<8x128xf32>
    %c0_12 = arith.constant 0 : index
    %c0_13 = arith.constant 0 : index
    %17 = vector.load %arg8[%c0_12, %c0_13] : memref<8x128xf32, #tpu.memory_space<vmem>>, vector<8x128xf32>
    tpu.vector_store %arg8[%c0_12, %c0_13], %16 {strides = array<i32>} : memref<8x128xf32, #tpu.memory_space<vmem>>, vector<8x128xf32>,
    return
  }
  func.func @transform_0(%arg0: i32, %arg1: i32) -> (i32, i32) {
    %c0_i32 = arith.constant 0 : i32
    %c0_i32_0 = arith.constant 0 : i32
    return %arg1, %c0_i32 : i32, i32
  }
  func.func @transform_1(%arg0: i32, %arg1: i32) -> (i32, i32) {
    %c0_i32 = arith.constant 0 : i32
    %c0_i32_0 = arith.constant 0 : i32
    %c0_i32_1 = arith.constant 0 : i32
    return %c0_i32, %c0_i32_0 : i32, i32
  }
  func.func @transform_2(%arg0: i32, %arg1: i32) -> (i32, i32) {
    %c0_i32 = arith.constant 0 : i32
    %c0_i32_0 = arith.constant 0 : i32
    %c0_i32_1 = arith.constant 0 : i32
    return %c0_i32, %c0_i32_0 : i32, i32
  }
  func.func @transform_3(%arg0: i32, %arg1: i32) -> (i32, i32) {
    %c0_i32 = arith.constant 0 : i32
    %c0_i32_0 = arith.constant 0 : i32
    return %c0_i32, %arg0 : i32, i32
  }
  func.func @transform_4(%arg0: i32, %arg1: i32) -> (i32, i32) {
    %c0_i32 = arith.constant 0 : i32
    %c0_i32_0 = arith.constant 0 : i32
    return %c0_i32, %arg0 : i32, i32
  }
  func.func @transform_5(%arg0: i32, %arg1: i32) -> (i32, i32) {
    %c0_i32 = arith.constant 0 : i32
    %c0_i32_0 = arith.constant 0 : i32
    return %c0_i32, %arg0 : i32, i32
  }
  func.func @transform_6(%arg0: i32, %arg1: i32) -> (i32, i32) {
    %c0_i32 = arith.constant 0 : i32
    return %arg1, %arg0 : i32, i32
  }
}

</mosaic_0001>

<llo_original>
// kernel: tpu_custom_call.1
$region0: #{tpu_custom_call.1}
  #allocation0 [shape = 'u32[]', space=smem, size = 0x4, offset = 0x4, fixed_abs, tag = 'smem constant byte address 0x4 - core index']
  #allocation1 [shape = 'u32[144,128]{1,0:T(1,128)}', space=vmem, size = 0x12000, scoped, tag = 'internal scratch']
  %s0 = inlined_call_operand.hbm [shape: f32[8,32], index: 0, kind: input, shape index: {}]
  %s1 = inlined_call_operand.vmem [shape: f32[1,32], index: 1, kind: input, shape index: {}]
  %s2 = inlined_call_operand.vmem [shape: f32[1,32], index: 2, kind: input, shape index: {}]
  %s3 = inlined_call_operand.hbm [shape: f32[32,128], index: 3, kind: input, shape index: {}]
  %s4 = inlined_call_operand.vmem [shape: f32[1,128], index: 4, kind: input, shape index: {}]
  %s5 = inlined_call_operand.vmem [shape: f32[1,128], index: 5, kind: input, shape index: {}]
  %s6 = inlined_call_operand.hbm [shape: f32[8,128], index: 6, kind: output, shape index: {}]
  %s7 = sld [smem:[#allocation0]]
  $region42: #{tpu_custom_call.1} parent=0
    _
  %s9 = ssub.s32 1, %s7
  %s10 = scalar_select 0, %s9, %s7
  $region1: #{tpu_custom_call.1} parent=0
    #allocation2 [shape = 'u8[4096]{0}', space=vmem, size = 0x1000, scoped, tag = 'input window, operand 0, single buffered']
    #allocation3 [shape = 's32[1]{0}', space=sflag, size = 0x4, scoped, tag = 'scoped memory for tpu_custom_call.1']
    #allocation4 [shape = 's32[1]{0}', space=sflag, size = 0x4, scoped, tag = 'scoped memory for tpu_custom_call.1']
    #allocation5 [shape = 'u8[16384]{0}', space=vmem, size = 0x4000, scoped, tag = 'input window, operand 3, single buffered']
    #allocation6 [shape = 's32[1]{0}', space=sflag, size = 0x4, scoped, tag = 'scoped memory for tpu_custom_call.1']
    #allocation7 [shape = 'u8[4096]{0}', space=vmem, size = 0x1000, scoped, tag = 'output window, operand 0, single buffered']
    %11 = vsyncpa [#allocation3], 0
    %12 = vsyncpa [#allocation6], 0
    %13 = vsyncpa [#allocation4], 0
    // Predicated region
    $region2: #{tpu_custom_call.1} parent=1 // pred_check
      _
    $region3: #{tpu_custom_call.1} parent=1 // pred_check_branch
      %15 = sbr.rel (0) target = $region5
    $region4: #{tpu_custom_call.1} parent=1 // pred_region
      %s17 = ssub.s32 128, 128
      %18 = vsyncadd [#allocation3], %s17
      %s20 = sshll.u32 [#allocation2], 4
      %s21 = int_to_ptr.vmem [resolvable:$true] %s20
      %23 = dma.hbm_to_vmem [thread:$0]  %s0, 128, %s21, [#allocation3]
    $region5: #{tpu_custom_call.1} parent=1 // pred_fallthru
      _
    // Predicated region
    $region6: #{tpu_custom_call.1} parent=1 // pred_check
      _
    $region7: #{tpu_custom_call.1} parent=1 // pred_check_branch
      %25 = sbr.rel (0) target = $region9
    $region8: #{tpu_custom_call.1} parent=1 // pred_region
      _
    $region9: #{tpu_custom_call.1} parent=1 // pred_fallthru
      _
    // Predicated region
    $region10: #{tpu_custom_call.1} parent=1 // pred_check
      _
    $region11: #{tpu_custom_call.1} parent=1 // pred_check_branch
      %27 = sbr.rel (0) target = $region13
    $region12: #{tpu_custom_call.1} parent=1 // pred_region
      _
    $region13: #{tpu_custom_call.1} parent=1 // pred_fallthru
      _
    // Predicated region
    $region14: #{tpu_custom_call.1} parent=1 // pred_check
      _
    $region15: #{tpu_custom_call.1} parent=1 // pred_check_branch
      %29 = sbr.rel (0) target = $region17
    $region16: #{tpu_custom_call.1} parent=1 // pred_region
      %s31 = ssub.s32 512, 512
      %32 = vsyncadd [#allocation6], %s31
      %s33 = sshll.u32 [#allocation5], 4
      %s34 = int_to_ptr.vmem [resolvable:$true] %s33
      %39 = dma.hbm_to_vmem [thread:$0]  %s3, 512, %s34, [#allocation6], 128, 128, 8
    $region17: #{tpu_custom_call.1} parent=1 // pred_fallthru
      _
    // Predicated region
    $region18: #{tpu_custom_call.1} parent=1 // pred_check
      _
    $region19: #{tpu_custom_call.1} parent=1 // pred_check_branch
      %41 = sbr.rel (0) target = $region21
    $region20: #{tpu_custom_call.1} parent=1 // pred_region
      _
    $region21: #{tpu_custom_call.1} parent=1 // pred_fallthru
      _
    // Predicated region
    $region22: #{tpu_custom_call.1} parent=1 // pred_check
      _
    $region23: #{tpu_custom_call.1} parent=1 // pred_check_branch
      %43 = sbr.rel (0) target = $region25
    $region24: #{tpu_custom_call.1} parent=1 // pred_region
      _
    $region25: #{tpu_custom_call.1} parent=1 // pred_fallthru
      _
    // Predicated region
    $region26: #{tpu_custom_call.1} parent=1 // pred_check
      _
    $region27: #{tpu_custom_call.1} parent=1 // pred_check_branch
      %45 = sbr.rel (0) target = $region29
    $region28: #{tpu_custom_call.1} parent=1 // pred_region
      %46 = dma.done [#allocation3], 128
    $region29: #{tpu_custom_call.1} parent=1 // pred_fallthru
      _
    // Predicated region
    $region30: #{tpu_custom_call.1} parent=1 // pred_check
      _
    $region31: #{tpu_custom_call.1} parent=1 // pred_check_branch
      %48 = sbr.rel (0) target = $region33
    $region32: #{tpu_custom_call.1} parent=1 // pred_region
      %49 = dma.done [#allocation6], 512
    $region33: #{tpu_custom_call.1} parent=1 // pred_fallthru
      _
    %v50 = vld [vmem:[#allocation2] sm:$0xff]
    %v51 = vld [vmem:[%s1] sm:$0x1]
    %v53 = vlaneseq
    %v54 = vshrl.u32 %v53, 7
    %v55 = vsub.s32 0, %v54
    %v56 = vrot.slane %v51, %v55
    %v58 = vmul.f32 %v50, %v56
    %v59 = vld [vmem:[%s2] sm:$0x1]
    %v61 = vlaneseq
    %v62 = vshrl.u32 %v61, 7
    %v63 = vsub.s32 0, %v62
    %v64 = vrot.slane %v59, %v63
    %v66 = vadd.f32 %v58, %v64
    %v67 = vmax.f32 %v66, 0.0
    %v68 = vld [vmem:[#allocation5] sm:$0xff]
    %v69 = vld [vmem:[#allocation5 + $0x8] sm:$0xff]
    %v70 = vld [vmem:[#allocation5 + $0x10] sm:$0xff]
    %v71 = vld [vmem:[#allocation5 + $0x18] sm:$0xff]
    %vm72 = vcmask 261120
    %v74 = vsel %vm72, %v67, 0
    %76 = vmatprep.subr.mxu0 0.0
    %77 = vmatpush1.msra.mxu0 %v68
    %78 = vmatprep.subr.mxu0 0.0
    %79 = vmatpush1.msra.mxu0 %v69
    %80 = vmatprep.subr.mxu0 0.0
    %81 = vmatpush1.msra.mxu0 %v70
    %82 = vmatprep.subr.mxu0 0.0
    %83 = vmatpush1.msra.mxu0 %v71
    %84 = vmatprep.subr.mxu0 0.0
    %85 = vmatpush1.msra.mxu0 0.0
    %86 = vmatprep.subr.mxu0 0.0
    %87 = vmatpush1.msra.mxu0 0.0
    %88 = vmatprep.subr.mxu0 0.0
    %89 = vmatpush1.msra.mxu0 0.0
    %90 = vmatprep.subr.mxu0 0.0
    %91 = vmatpush1.msra.mxu0 0.0
    %92 = vmatprep.subr.mxu0 0.0
    %93 = vmatpush1.msra.mxu0 0.0
    %94 = vmatprep.subr.mxu0 0.0
    %95 = vmatpush1.msra.mxu0 0.0
    %96 = vmatprep.subr.mxu0 0.0
    %97 = vmatpush1.msra.mxu0 0.0
    %98 = vmatprep.subr.mxu0 0.0
    %99 = vmatpush1.msra.mxu0 0.0
    %100 = vmatprep.subr.mxu0 0.0
    %101 = vmatpush1.msra.mxu0 0.0
    %102 = vmatprep.subr.mxu0 0.0
    %103 = vmatpush1.msra.mxu0 0.0
    %104 = vmatprep.subr.mxu0 0.0
    %105 = vmatpush1.msra.mxu0 0.0
    %106 = vmatprep.subr.mxu0 0.0
    %107 = vmatpush1.msra.mxu0 0.0
    %108 = vmatprep.subr.mxu0 0.0
    %109 = vmatpush1.msra.mxu0 0.0
    %110 = vmatprep.subr.mxu0 0.0
    %111 = vmatpush1.msra.mxu0 0.0
    %112 = vmatprep.subr.mxu0 0.0
    %113 = vmatpush1.msra.mxu0 0.0
    %114 = vmatprep.subr.mxu0 0.0
    %115 = vmatpush1.msra.mxu0 0.0
    %116 = vmatprep.subr.mxu0 0.0
    %117 = vmatpush1.msra.mxu0 0.0
    %118 = vmatprep.subr.mxu0 0.0
    %119 = vmatpush1.msra.mxu0 0.0
    %120 = vmatprep.subr.mxu0 0.0
    %121 = vmatpush1.msra.mxu0 0.0
    %122 = vmatprep.subr.mxu0 0.0
    %123 = vmatpush1.msra.mxu0 0.0
    %124 = vmatprep.subr.mxu0 0.0
    %125 = vmatpush1.msra.mxu0 0.0
    %126 = vmatprep.subr.mxu0 0.0
    %127 = vmatpush1.msra.mxu0 0.0
    %128 = vmatprep.subr.mxu0 0.0
    %129 = vmatpush1.msra.mxu0 0.0
    %130 = vmatprep.subr.mxu0 0.0
    %131 = vmatpush1.msra.mxu0 0.0
    %132 = vmatprep.subr.mxu0 0.0
    %133 = vmatpush1.msra.mxu0 0.0
    %134 = vmatprep.subr.mxu0 0.0
    %135 = vmatpush1.msra.mxu0 0.0
    %136 = vmatprep.subr.mxu0 0.0
    %137 = vmatpush1.msra.mxu0 0.0
    %138 = vmatprep.subr.mxu0 0.0
    %139 = vmatpush1.msra.mxu0 0.0
    %140 = vmatprep.mubr.f32.mxu0 0.0
    %141 = vmatmul.mubr.f32.gmra.mrb[0].mxu0 %v74
    %v142 = vpop.f32.mrb[0].mxu0
    %v143 = vadd.f32 0.0, %v142
    %v144 = vpop.f32.mrb[0].mxu0
    %145 = vdwg.mxu0
    %v146 = vld [vmem:[%s4] sm:$0x1]
    %v148 = vlaneseq
    %v149 = vshrl.u32 %v148, 7
    %v150 = vsub.s32 0, %v149
    %v151 = vrot.slane %v146, %v150
    %v153 = vmul.f32 %v143, %v151
    %v154 = vld [vmem:[%s5] sm:$0x1]
    %v156 = vlaneseq
    %v157 = vshrl.u32 %v156, 7
    %v158 = vsub.s32 0, %v157
    %v159 = vrot.slane %v154, %v158
    %v161 = vadd.f32 %v153, %v159
    %162 = vst [vmem:[#allocation7] sm:$0xff] %v161
    // Predicated region
    $region34: #{tpu_custom_call.1} parent=1 // pred_check
      _
    $region35: #{tpu_custom_call.1} parent=1 // pred_check_branch
      %164 = sbr.rel (0) target = $region37
    $region36: #{tpu_custom_call.1} parent=1 // pred_region
      %s166 = ssub.s32 128, 128
      %167 = vsyncadd [#allocation4], %s166
      %s169 = sshll.u32 [#allocation7], 4
      %s170 = int_to_ptr.vmem [resolvable:$true] %s169
      %172 = dma.vmem_to_hbm [thread:$0]  %s170, 128, %s6, [#allocation4]
    $region37: #{tpu_custom_call.1} parent=1 // pred_fallthru
      _
    // Predicated region
    $region38: #{tpu_custom_call.1} parent=1 // pred_check
      _
    $region39: #{tpu_custom_call.1} parent=1 // pred_check_branch
      %174 = sbr.rel (0) target = $region41
    $region40: #{tpu_custom_call.1} parent=1 // pred_region
      %175 = dma.done [#allocation4], 128
    $region41: #{tpu_custom_call.1} parent=1 // pred_fallthru
      _
    %176 = vsyncpa [#allocation3], 1
    %177 = vsyncpa [#allocation6], 1
    %178 = vsyncpa [#allocation4], 1

</llo_original>
